<compile_context>
chip_gen: v7x
topology: tpu7x:2x2x1
jax: 0.10.0
libtpu: 0.0.40
codegen_flags: <defaults>
</compile_context>

<pallas_src>
import functools
import math

import numpy as np
import jax
import jax.numpy as jnp
from jax import lax
from jax.experimental import pallas as pl
from jax.experimental.pallas import tpu as pltpu

LANE = 128
_TARGET_OUT_TILE_BYTES = 6 << 20     # ~6 MiB output tile (double-buffered by Pallas)
_VMEM_LIMIT_BYTES = 48 << 20         # explicit scoped-VMEM limit; fits v7x's 64 MiB part


def _round_up(v, k):
    return ((v + k - 1) // k) * k


# ---------------------------------------------------------------------------
# Kernel
# ---------------------------------------------------------------------------
def _sine_embedding_kernel(x_ref, fsbd_ref, w_ref, b_ref, o_ref, *, pack):
    # x_ref:    (TM, P)      P logical rows packed per physical row
    # fsbd_ref: (P, K)       fs placed block-diagonally: fsbd[p, p*n + j] = fs[j]
    # w_ref:    (K, D_out)   block-diagonal Linear weight (blocks = W.T)
    # b_ref:    (1, D_out)   bias tiled P times (zero padded)
    # o_ref:    (TM, D_out)  lane-dense output tile
    x = x_ref[...]
    # Exact VPU block-diagonal expansion of phases: off-group contributions are exact
    # zeros, so phases match the reference fl(x * fs) bit-for-bit (sin is sensitive).
    phases = x[:, 0:1] * fsbd_ref[0:1, :]
    for p in range(1, pack):
        phases = phases + x[:, p:p + 1] * fsbd_ref[p:p + 1, :]
    s = jnp.sin(phases)                                               # EUP transcendentals
    o_ref[...] = (
        jnp.dot(s, w_ref[...], preferred_element_type=jnp.float32)   # MXU (plenty of slack)
        + b_ref[...]
    ).astype(o_ref.dtype)


# ---------------------------------------------------------------------------
# Parameter packing (build once, reuse every call)
# ---------------------------------------------------------------------------
class SineEmbeddingPacked:
    """Layout-transformed SineEmbedding parameters (block-diagonal weight, tiled fs/bias)."""

    def __init__(self, fs, weight, bias, out_dtype=jnp.float32):
        fs = jnp.asarray(fs, jnp.float32)              # (n,)
        weight = jnp.asarray(weight, jnp.float32)      # (hidden, n)  -- torch Linear layout
        bias = jnp.asarray(bias, jnp.float32)          # (hidden,)
        n = fs.shape[0]
        hidden = weight.shape[0]

        pack = max(1, LANE // hidden) if hidden < LANE else 1
        k_in = pack * n
        d_out = _round_up(pack * hidden, LANE)

        wt = weight.T                                   # (n, hidden)
        w_bd = jnp.zeros((k_in, d_out), jnp.float32)
        fs_bd = jnp.zeros((pack, k_in), jnp.float32)
        b_tiled = jnp.zeros((1, d_out), jnp.float32)
        for p in range(pack):
            w_bd = w_bd.at[p * n:(p + 1) * n, p * hidden:(p + 1) * hidden].set(wt)
            fs_bd = fs_bd.at[p, p * n:(p + 1) * n].set(fs)
            b_tiled = b_tiled.at[0, p * hidden:(p + 1) * hidden].set(bias)

        self.w_bd = w_bd
        self.fs_bd = fs_bd
        self.b_tiled = b_tiled
        self.n = n
        self.hidden = hidden
        self.pack = pack
        self.k_in = k_in
        self.d_out = d_out
        self.out_dtype = out_dtype


# ---------------------------------------------------------------------------
# Tiling
# ---------------------------------------------------------------------------
def _choose_tiling(m_phys, d_out):
    """Pick (tile_rows, padded_phys_rows): big tiles to amortize ~0.35us/step overhead,
    capped by a VMEM budget, with at most 511 rows of padding waste for large M."""
    bytes_per_row = (d_out + LANE) * 4                      # out row + lane-padded x row
    vmem_budget = _VMEM_LIMIT_BYTES // 2 - (1 << 20)        # headroom for weights/bias
    tm_budget = max(8, vmem_budget // (2 * bytes_per_row))  # 2 buffers (double-buffered)

    tm_target = min(_TARGET_OUT_TILE_BYTES // (d_out * 4), 8192)
    tm_target = max(256, tm_target)
    tm_target = min(tm_target, tm_budget)                   # VMEM guard wins over the floor
    tm_target = max(8, (tm_target // 8) * 8)

    m8 = _round_up(max(m_phys, 1), 8)
    if m8 <= tm_target:
        return m8, m8                                       # single step, minimal padding
    m_pad = _round_up(m_phys, 512)
    tm = 512
    while tm * 2 <= tm_target and m_pad % (tm * 2) == 0:
        tm *= 2
    return tm, m_pad


# ---------------------------------------------------------------------------
# Wrapper
# ---------------------------------------------------------------------------
def sine_embedding_packed(x, params: SineEmbeddingPacked):
    """x: arbitrary-shaped float array. Returns x.shape + (hidden,)."""
    P, k_in, d_out, hidden = params.pack, params.k_in, params.d_out, params.hidden

    lead_shape = x.shape
    m = int(np.prod(lead_shape)) if lead_shape else 1
    m_phys = -(-m // P)                                     # ceil(m / P)
    tm, m_phys_pad = _choose_tiling(m_phys, d_out)
    grid = (m_phys_pad // tm,)

    x_flat = x.reshape(m).astype(jnp.float32)
    x2d = jnp.pad(x_flat, (0, m_phys_pad * P - m)).reshape(m_phys_pad, P)

    out_itemsize = np.dtype(params.out_dtype).itemsize
    kernel = functools.partial(_sine_embedding_kernel, pack=P)

    out = pl.pallas_call(
        kernel,
        out_shape=jax.ShapeDtypeStruct((m_phys_pad, d_out), params.out_dtype),
        grid=grid,
        in_specs=[
            pl.BlockSpec((tm, P), lambda i: (i, 0)),         # x: streamed per row tile
            pl.BlockSpec((P, k_in), lambda i: (0, 0)),       # fs (block-diag): resident
            pl.BlockSpec((k_in, d_out), lambda i: (0, 0)),   # W (block-diag): resident
            pl.BlockSpec((1, d_out), lambda i: (0, 0)),      # bias: resident
        ],
        out_specs=pl.BlockSpec((tm, d_out), lambda i: (i, 0)),
        compiler_params=pltpu.CompilerParams(
            dimension_semantics=("parallel",),               # megacore split on v7x
            vmem_limit_bytes=_VMEM_LIMIT_BYTES,
        ),
        cost_estimate=pl.CostEstimate(
            flops=2 * m_phys_pad * k_in * (d_out + P),
            transcendentals=m_phys_pad * k_in,
            bytes_accessed=(m_phys_pad * P * 4
                            + m_phys_pad * d_out * out_itemsize
                            + (P * k_in + k_in * d_out + d_out) * 4),
        ),
    )(x2d, params.fs_bd, params.w_bd, params.b_tiled)

    if d_out != P * hidden:                                  # only if hidden doesn't divide 128
        out = out[:, :P * hidden]
    y = out.reshape(m_phys_pad * P, hidden)                  # contiguous reshape (free)
    if m_phys_pad * P != m:
        y = y[:m]                                            # contiguous-prefix slice only
    return y.reshape(*lead_shape, hidden)


def sine_embedding(x, fs, weight, bias):
    """Convenience wrapper. For hot loops, build SineEmbeddingPacked once and reuse it."""
    return sine_embedding_packed(x, SineEmbeddingPacked(fs, weight, bias))


def make_sine_embedding_params(n, hidden, w0=0.001, w1=10.0, scale="log", key=None):
    """Deterministic parameter construction mirroring SineEmbedding.__init__."""
    if scale == "log":
        lo, hi = np.log(w0), np.log(w1)
        ws = np.exp(np.linspace(lo, hi, n, dtype=np.float64))
    else:
        ws = np.linspace(w0, w1, n, dtype=np.float64)
    fs = jnp.asarray(2.0 * math.pi / ws, dtype=jnp.float32)

    if key is None:
        key = jax.random.PRNGKey(0)
    kw, kb = jax.random.split(key)
    # nn.Linear default init: U(-1/sqrt(n), 1/sqrt(n)) for both weight and bias
    bound = 1.0 / math.sqrt(n)
    weight = jax.random.uniform(kw, (hidden, n), jnp.float32, -bound, bound)
    bias = jax.random.uniform(kb, (hidden,), jnp.float32, -bound, bound)
    return fs, weight, bias


if __name__ == "__main__":
    key = jax.random.PRNGKey(0)
    k_param, k_x = jax.random.split(key)

    n, hidden = 16, 32
    batch, seq = 2, 8

    fs, weight, bias = make_sine_embedding_params(n, hidden, key=k_param)
    packed = SineEmbeddingPacked(fs, weight, bias)          # hoisted: built once
    x = jax.random.uniform(k_x, (batch, seq), jnp.float32, 0.0, 5.0)

    y = sine_embedding_packed(x, packed)
    y = jax.block_until_ready(y)

    # pure-JAX reference check
    ref = jnp.sin(x[..., None] * fs) @ weight.T + bias
    assert y.shape == (batch, seq, hidden)
    np.testing.assert_allclose(np.asarray(y), np.asarray(ref), rtol=1e-5, atol=2e-5)

    print("KERNEL_OK")
</pallas_src>

<mosaic_0001>
module attributes {stable_mosaic.version = 11 : i64} {
  func.func @_sine_embedding_kernel(%arg0: i32, %arg1: memref<8x4xf32, #tpu.memory_space<vmem>>, %arg2: memref<4x64xf32, #tpu.memory_space<vmem>>, %arg3: memref<64x128xf32, #tpu.memory_space<vmem>>, %arg4: memref<1x128xf32, #tpu.memory_space<vmem>>, %arg5: memref<8x128xf32, #tpu.memory_space<vmem>>) attributes {dimension_semantics = [#tpu.dimension_semantics<parallel>], iteration_bounds = array<i64: 1>, scalar_prefetch = 0 : i64, scratch_operands = 0 : i64, tpu.core_type = #tpu.core_type<tc>, window_params = [{transform_indices = @transform_0, window_bounds = array<i64: 8, 4>}, {pipeline_mode = #tpu.pipeline_mode<synchronous>, transform_indices = @transform_1, window_bounds = array<i64: 4, 64>}, {pipeline_mode = #tpu.pipeline_mode<synchronous>, transform_indices = @transform_2, window_bounds = array<i64: 64, 128>}, {pipeline_mode = #tpu.pipeline_mode<synchronous>, transform_indices = @transform_3, window_bounds = array<i64: 1, 128>}, {transform_indices = @transform_4, window_bounds = array<i64: 8, 128>}]} {
    %c0 = arith.constant 0 : index
    %c0_0 = arith.constant 0 : index
    %0 = vector.load %arg1[%c0, %c0_0] : memref<8x4xf32, #tpu.memory_space<vmem>>, vector<8x4xf32>
    %1 = vector.extract_strided_slice %0 {offsets = [0, 0], sizes = [8, 1], strides = [1, 1]} : vector<8x4xf32> to vector<8x1xf32>
    %c0_1 = arith.constant 0 : index
    %c0_2 = arith.constant 0 : index
    %2 = vector.load %arg2[%c0_1, %c0_2] : memref<4x64xf32, #tpu.memory_space<vmem>>, vector<1x64xf32>
    %3 = vector.broadcast %1 : vector<8x1xf32> to vector<8x64xf32>
    %4 = vector.broadcast %2 : vector<1x64xf32> to vector<8x64xf32>
    %5 = arith.mulf %3, %4 : vector<8x64xf32>
    %6 = vector.extract_strided_slice %0 {offsets = [0, 1], sizes = [8, 1], strides = [1, 1]} : vector<8x4xf32> to vector<8x1xf32>
    %c1 = arith.constant 1 : index
    %c0_3 = arith.constant 0 : index
    %7 = vector.load %arg2[%c1, %c0_3] : memref<4x64xf32, #tpu.memory_space<vmem>>, vector<1x64xf32>
    %8 = vector.broadcast %6 : vector<8x1xf32> to vector<8x64xf32>
    %9 = vector.broadcast %7 : vector<1x64xf32> to vector<8x64xf32>
    %10 = arith.mulf %8, %9 : vector<8x64xf32>
    %11 = arith.addf %5, %10 : vector<8x64xf32>
    %12 = vector.extract_strided_slice %0 {offsets = [0, 2], sizes = [8, 1], strides = [1, 1]} : vector<8x4xf32> to vector<8x1xf32>
    %c2 = arith.constant 2 : index
    %c0_4 = arith.constant 0 : index
    %13 = vector.load %arg2[%c2, %c0_4] : memref<4x64xf32, #tpu.memory_space<vmem>>, vector<1x64xf32>
    %14 = vector.broadcast %12 : vector<8x1xf32> to vector<8x64xf32>
    %15 = vector.broadcast %13 : vector<1x64xf32> to vector<8x64xf32>
    %16 = arith.mulf %14, %15 : vector<8x64xf32>
    %17 = arith.addf %11, %16 : vector<8x64xf32>
    %18 = vector.extract_strided_slice %0 {offsets = [0, 3], sizes = [8, 1], strides = [1, 1]} : vector<8x4xf32> to vector<8x1xf32>
    %c3 = arith.constant 3 : index
    %c0_5 = arith.constant 0 : index
    %19 = vector.load %arg2[%c3, %c0_5] : memref<4x64xf32, #tpu.memory_space<vmem>>, vector<1x64xf32>
    %20 = vector.broadcast %18 : vector<8x1xf32> to vector<8x64xf32>
    %21 = vector.broadcast %19 : vector<1x64xf32> to vector<8x64xf32>
    %22 = arith.mulf %20, %21 : vector<8x64xf32>
    %23 = arith.addf %17, %22 : vector<8x64xf32>
    %24 = math.sin %23 : vector<8x64xf32>
    %c0_6 = arith.constant 0 : index
    %c0_7 = arith.constant 0 : index
    %25 = vector.load %arg3[%c0_6, %c0_7] : memref<64x128xf32, #tpu.memory_space<vmem>>, vector<64x128xf32>
    %cst = arith.constant dense<0.000000e+00> : vector<8x128xf32>
    %26 = tpu.matmul %24, %25, %cst {dimension_numbers = #tpu.dot_dimension_numbers<[1], [0], [0], [1], [0, 0, 1, 1], [], []>} : vector<8x64xf32>, vector<64x128xf32>, vector<8x128xf32> -> vector<8x128xf32>
    %c0_8 = arith.constant 0 : index
    %c0_9 = arith.constant 0 : index
    %27 = vector.load %arg4[%c0_8, %c0_9] : memref<1x128xf32, #tpu.memory_space<vmem>>, vector<1x128xf32>
    %28 = vector.broadcast %27 : vector<1x128xf32> to vector<8x128xf32>
    %29 = arith.addf %26, %28 : vector<8x128xf32>
    %c0_10 = arith.constant 0 : index
    %c0_11 = arith.constant 0 : index
    %30 = vector.load %arg5[%c0_10, %c0_11] : memref<8x128xf32, #tpu.memory_space<vmem>>, vector<8x128xf32>
    tpu.vector_store %arg5[%c0_10, %c0_11], %29 {strides = array<i32>} : memref<8x128xf32, #tpu.memory_space<vmem>>, vector<8x128xf32>,
    return
  }
  func.func @transform_0(%arg0: i32) -> (i32, i32) {
    %c0_i32 = arith.constant 0 : i32
    %c0_i32_0 = arith.constant 0 : i32
    return %arg0, %c0_i32 : i32, i32
  }
  func.func @transform_1(%arg0: i32) -> (i32, i32) {
    %c0_i32 = arith.constant 0 : i32
    %c0_i32_0 = arith.constant 0 : i32
    %c0_i32_1 = arith.constant 0 : i32
    return %c0_i32, %c0_i32_0 : i32, i32
  }
  func.func @transform_2(%arg0: i32) -> (i32, i32) {
    %c0_i32 = arith.constant 0 : i32
    %c0_i32_0 = arith.constant 0 : i32
    %c0_i32_1 = arith.constant 0 : i32
    return %c0_i32, %c0_i32_0 : i32, i32
  }
  func.func @transform_3(%arg0: i32) -> (i32, i32) {
    %c0_i32 = arith.constant 0 : i32
    %c0_i32_0 = arith.constant 0 : i32
    %c0_i32_1 = arith.constant 0 : i32
    return %c0_i32, %c0_i32_0 : i32, i32
  }
  func.func @transform_4(%arg0: i32) -> (i32, i32) {
    %c0_i32 = arith.constant 0 : i32
    %c0_i32_0 = arith.constant 0 : i32
    return %arg0, %c0_i32 : i32, i32
  }
}

</mosaic_0001>

<llo_original>
// kernel: tpu_custom_call.1
$region0: #{tpu_custom_call.1}
  #allocation0 [shape = 'u32[]', space=smem, size = 0x4, offset = 0x4, fixed_abs, tag = 'smem constant byte address 0x4 - core index']
  #allocation1 [shape = 'u32[144,128]{1,0:T(1,128)}', space=vmem, size = 0x12000, scoped, tag = 'internal scratch']
  %s0 = inlined_call_operand.vmem [shape: f32[8,4], index: 0, kind: input, shape index: {}]
  %s1 = inlined_call_operand.vmem [shape: f32[4,64], index: 1, kind: input, shape index: {}]
  %s2 = inlined_call_operand.hbm [shape: f32[64,128], index: 2, kind: input, shape index: {}]
  %s3 = inlined_call_operand.vmem [shape: f32[1,128], index: 3, kind: input, shape index: {}]
  %s4 = inlined_call_operand.hbm [shape: f32[8,128], index: 4, kind: output, shape index: {}]
  %s5 = sld [smem:[#allocation0]]
  $region30: #{tpu_custom_call.1} parent=0
    _
  %s7 = ssub.s32 1, %s5
  %s8 = scalar_select 0, %s7, %s5
  $region1: #{tpu_custom_call.1} parent=0
    #allocation2 [shape = 'u8[32768]{0}', space=vmem, size = 0x8000, scoped, tag = 'input window, operand 2, single buffered']
    #allocation3 [shape = 's32[1]{0}', space=sflag, size = 0x4, scoped, tag = 'scoped memory for tpu_custom_call.1']
    #allocation4 [shape = 's32[1]{0}', space=sflag, size = 0x4, scoped, tag = 'scoped memory for tpu_custom_call.1']
    #allocation5 [shape = 'u8[4096]{0}', space=vmem, size = 0x1000, scoped, tag = 'output window, operand 0, single buffered']
    %9 = vsyncpa [#allocation3], 0
    %10 = vsyncpa [#allocation4], 0
    // Predicated region
    $region2: #{tpu_custom_call.1} parent=1 // pred_check
      _
    $region3: #{tpu_custom_call.1} parent=1 // pred_check_branch
      %12 = sbr.rel (0) target = $region5
    $region4: #{tpu_custom_call.1} parent=1 // pred_region
      _
    $region5: #{tpu_custom_call.1} parent=1 // pred_fallthru
      _
    // Predicated region
    $region6: #{tpu_custom_call.1} parent=1 // pred_check
      _
    $region7: #{tpu_custom_call.1} parent=1 // pred_check_branch
      %14 = sbr.rel (0) target = $region9
    $region8: #{tpu_custom_call.1} parent=1 // pred_region
      _
    $region9: #{tpu_custom_call.1} parent=1 // pred_fallthru
      _
    // Predicated region
    $region10: #{tpu_custom_call.1} parent=1 // pred_check
      _
    $region11: #{tpu_custom_call.1} parent=1 // pred_check_branch
      %16 = sbr.rel (0) target = $region13
    $region12: #{tpu_custom_call.1} parent=1 // pred_region
      %s18 = ssub.s32 1024, 1024
      %19 = vsyncadd [#allocation3], %s18
      %s20 = sshll.u32 [#allocation2], 4
      %s21 = int_to_ptr.vmem [resolvable:$true] %s20
      %26 = dma.hbm_to_vmem [thread:$0]  %s2, 1024, %s21, [#allocation3], 128, 128, 8
    $region13: #{tpu_custom_call.1} parent=1 // pred_fallthru
      _
    // Predicated region
    $region14: #{tpu_custom_call.1} parent=1 // pred_check
      _
    $region15: #{tpu_custom_call.1} parent=1 // pred_check_branch
      %28 = sbr.rel (0) target = $region17
    $region16: #{tpu_custom_call.1} parent=1 // pred_region
      _
    $region17: #{tpu_custom_call.1} parent=1 // pred_fallthru
      _
    // Predicated region
    $region18: #{tpu_custom_call.1} parent=1 // pred_check
      _
    $region19: #{tpu_custom_call.1} parent=1 // pred_check_branch
      %30 = sbr.rel (0) target = $region21
    $region20: #{tpu_custom_call.1} parent=1 // pred_region
      %31 = dma.done [#allocation3], 1024
    $region21: #{tpu_custom_call.1} parent=1 // pred_fallthru
      _
    %v32 = vld [vmem:[%s0] sm:$0xff]
    %v33 = vld [vmem:[%s1] sm:$0x1]
    %35 = vset.pattern.permute.xlu0 0
    %36 = vperm.xlu0 %35, %v32
    %v37 = vpop.permute.xlu0 %36
    %v39 = vlaneseq
    %v40 = vshrl.u32 %v39, 7
    %v41 = vsub.s32 0, %v40
    %v42 = vrot.slane %v33, %v41
    %v43 = vmul.f32 %v37, %v42
    %v44 = vld [vmem:[%s1 + $0x1] sm:$0x1]
    %45 = vset.pattern.permute.xlu0 1
    %46 = vperm.xlu0 %45, %v32
    %v47 = vpop.permute.xlu0 %46
    %v49 = vlaneseq
    %v50 = vshrl.u32 %v49, 7
    %v51 = vsub.s32 0, %v50
    %v52 = vrot.slane %v44, %v51
    %v53 = vmul.f32 %v47, %v52
    %v54 = vadd.f32 %v43, %v53
    %v55 = vld [vmem:[%s1 + $0x2] sm:$0x1]
    %56 = vset.pattern.permute.xlu0 2
    %57 = vperm.xlu0 %56, %v32
    %v58 = vpop.permute.xlu0 %57
    %v60 = vlaneseq
    %v61 = vshrl.u32 %v60, 7
    %v62 = vsub.s32 0, %v61
    %v63 = vrot.slane %v55, %v62
    %v64 = vmul.f32 %v58, %v63
    %v65 = vadd.f32 %v54, %v64
    %v66 = vld [vmem:[%s1 + $0x3] sm:$0x1]
    %67 = vset.pattern.permute.xlu0 3
    %68 = vperm.xlu0 %67, %v32
    %v69 = vpop.permute.xlu0 %68
    %v71 = vlaneseq
    %v72 = vshrl.u32 %v71, 7
    %v73 = vsub.s32 0, %v72
    %v74 = vrot.slane %v66, %v73
    %v75 = vmul.f32 %v69, %v74
    %v76 = vadd.f32 %v65, %v75
    %v77 = vand.u32 2147483647, %v76
    %vm78 = vcmp.le.f32.partialorder %v77, 0.7853982
    %vm79 = vcmp.lt.s32.totalorder %v76, 0
    %v80 = vand.u32 %v76, 2139095040
    %v81 = vshrl.u32 %v80, 23
    %v82 = vsub.s32 %v81, 127
    %v83 = vand.u32 2147483647, %v76
    %v84 = vand.u32 %v83, 8388607
    %v85 = vor.u32 %v84, 8388608
    %v86 = vsub.s32 0, %v85
    %v87 = vadd.s32 %v82, 1
    %vm88 = vcmp.gt.s32.totalorder %v87, 0
    %v89 = vsel %vm88, %v87, 0
    %v90 = vshrl.u32 %v89, 5
    %v91 = vand.u32 %v89, 31
    %v92 = vsub.s32 32, %v91
    %v93 = vshrl.u32 683565275, %v92
    %v94 = vshll.u32 683565275, %v91
    %v95 = vshrl.u32 2475754826, %v92
    %v96 = vor.u32 %v94, %v95
    %v97 = vshll.u32 2475754826, %v91
    %v98 = vshrl.u32 2131351028, %v92
    %v99 = vor.u32 %v97, %v98
    %v100 = vshll.u32 2131351028, %v91
    %v101 = vshrl.u32 2102212464, %v92
    %v102 = vor.u32 %v100, %v101
    %v103 = vshll.u32 2102212464, %v91
    %v104 = vshrl.u32 920167782, %v92
    %v105 = vor.u32 %v103, %v104
    %v106 = vshll.u32 920167782, %v91
    %v107 = vshrl.u32 1326507024, %v92
    %v108 = vor.u32 %v106, %v107
    %vm109 = vcmp.lt.s32.totalorder %v90, 1
    %vm110 = vcmp.lt.s32.totalorder %v90, 2
    %vm111 = vcmp.lt.s32.totalorder %v90, 3
    %vm112 = vcmp.lt.s32.totalorder %v90, 4
    %v113 = vsel %vm109, %v93, %v96
    %v114 = vsel %vm112, %v102, 2102212464
    %v115 = vsel %vm111, %v99, %v114
    %v116 = vsel %vm110, %v113, %v115
    %v117 = vsel %vm109, %v96, %v99
    %v118 = vsel %vm112, %v105, 920167782
    %v119 = vsel %vm111, %v102, %v118
    %v120 = vsel %vm110, %v117, %v119
    %v121 = vsel %vm109, %v99, %v102
    %v122 = vsel %vm112, %v108, 1326507024
    %v123 = vsel %vm111, %v105, %v122
    %v124 = vsel %vm110, %v121, %v123
    %v125 = vshll.u32 %v85, 8
    %v126 = vmul.u32.u64.compose %v125, %v124
    %v127 = vextract.low.u32 %v126
    %v128 = vextract.high.u32 %v126
    %v129 = vmul.u32.u64.compose %v125, %v120
    %v130 = vextract.low.u32 %v129
    %v131 = vextract.high.u32 %v129
    %v132 = vmul.u32 %v125, %v116
    %v133 = vadd.s32 %v128, %v130
    %vm134 = vc.u32 %v128, %v130
    %v135 = vadd.s32 %v131, 1
    %v136 = vsel %vm134, %v135, %v131
    %v137 = vadd.s32 %v132, %v136
    %v138 = vadd.s32 %v137, 536870912
    %v139 = vshrl.u32 %v138, 30
    %v140 = vshll.u32 %v139, 30
    %v141 = vsub.s32 %v137, %v140
    %vm142 = vcmp.lt.s32.totalorder %v141, 0
    %v143 = vsub.s32 0, %v141
    %v144 = vsel %vm142, %v143, %v141
    %v145 = vclz %v144
    %v146 = vsub.s32 %v145, 2
    %vm147 = vcmp.gt.s32.totalorder 0, %v146
    %v148 = vsel %vm147, 0, %v146
    %v149 = vsub.s32 32, %v148
    %v150 = vshll.u32 %v141, %v148
    %v151 = vshrl.u32 %v133, %v149
    %v152 = vor.u32 %v150, %v151
    %v153 = vsub.s32 4294967266, %v148
    %v154 = vadd.s32 %v153, 127
    %v155 = vshll.u32 %v154, 23
    %v156 = vor.u32 4788187, %v155
    %v157 = vand.u32 2147483647, %v156
    %v159 = vcvt.s32.f32 %v152
    %v160 = vmul.f32 %v159, %v157
    %v161 = vxor.u32 %v160, 2147483648
    %v162 = vsel %vm79, %v161, %v160
    %v163 = vsub.s32 4, %v139
    %v164 = vsel %vm79, %v163, %v139
    %v165 = vsel %vm78, %v76, %v162
    %v166 = vsel %vm78, 0, %v164
    %v167 = vcosq.f32.pop %v165
    %v168 = vsinq.f32.pop %v165
    %vm169 = vweird.f32 %v76
    %v170 = vadd.s32 %v166, 3
    %v171 = vand.u32 %v170, 3
    %vm172 = vcmp.lt.s32.totalorder %v171, 2
    %vm173 = vcmp.eq.s32.totalorder %v171, 0
    %v174 = vxor.u32 %v168, 2147483648
    %v175 = vsel %vm173, %v167, %v174
    %vm176 = vcmp.eq.s32.totalorder %v171, 2
    %v177 = vxor.u32 %v167, 2147483648
    %v178 = vsel %vm176, %v177, %v168
    %v179 = vsel %vm172, %v175, %v178
    %v180 = vsel %vm169, nan, %v179
    %v181 = vld [vmem:[#allocation2] sm:$0xff]
    %v182 = vld [vmem:[#allocation2 + $0x8] sm:$0xff]
    %v183 = vld [vmem:[#allocation2 + $0x10] sm:$0xff]
    %v184 = vld [vmem:[#allocation2 + $0x18] sm:$0xff]
    %v185 = vld [vmem:[#allocation2 + $0x20] sm:$0xff]
    %v186 = vld [vmem:[#allocation2 + $0x28] sm:$0xff]
    %v187 = vld [vmem:[#allocation2 + $0x30] sm:$0xff]
    %v188 = vld [vmem:[#allocation2 + $0x38] sm:$0xff]
    %v189 = vld [vmem:[%s3] sm:$0x1]
    %v191 = vlaneseq
    %v192 = vshrl.u32 %v191, 7
    %v193 = vsub.s32 0, %v192
    %v194 = vrot.slane %v189, %v193
    %vm196 = vcmask 523264
    %v198 = vsel %vm196, %v180, 0
    %200 = vmatprep.subr.mxu0 0.0
    %201 = vmatpush1.msra.mxu0 %v181
    %202 = vmatprep.subr.mxu0 0.0
    %203 = vmatpush1.msra.mxu0 %v182
    %204 = vmatprep.subr.mxu0 0.0
    %205 = vmatpush1.msra.mxu0 %v183
    %206 = vmatprep.subr.mxu0 0.0
    %207 = vmatpush1.msra.mxu0 %v184
    %208 = vmatprep.subr.mxu0 0.0
    %209 = vmatpush1.msra.mxu0 %v185
    %210 = vmatprep.subr.mxu0 0.0
    %211 = vmatpush1.msra.mxu0 %v186
    %212 = vmatprep.subr.mxu0 0.0
    %213 = vmatpush1.msra.mxu0 %v187
    %214 = vmatprep.subr.mxu0 0.0
    %215 = vmatpush1.msra.mxu0 %v188
    %216 = vmatprep.subr.mxu0 0.0
    %217 = vmatpush1.msra.mxu0 0.0
    %218 = vmatprep.subr.mxu0 0.0
    %219 = vmatpush1.msra.mxu0 0.0
    %220 = vmatprep.subr.mxu0 0.0
    %221 = vmatpush1.msra.mxu0 0.0
    %222 = vmatprep.subr.mxu0 0.0
    %223 = vmatpush1.msra.mxu0 0.0
    %224 = vmatprep.subr.mxu0 0.0
    %225 = vmatpush1.msra.mxu0 0.0
    %226 = vmatprep.subr.mxu0 0.0
    %227 = vmatpush1.msra.mxu0 0.0
    %228 = vmatprep.subr.mxu0 0.0
    %229 = vmatpush1.msra.mxu0 0.0
    %230 = vmatprep.subr.mxu0 0.0
    %231 = vmatpush1.msra.mxu0 0.0
    %232 = vmatprep.subr.mxu0 0.0
    %233 = vmatpush1.msra.mxu0 0.0
    %234 = vmatprep.subr.mxu0 0.0
    %235 = vmatpush1.msra.mxu0 0.0
    %236 = vmatprep.subr.mxu0 0.0
    %237 = vmatpush1.msra.mxu0 0.0
    %238 = vmatprep.subr.mxu0 0.0
    %239 = vmatpush1.msra.mxu0 0.0
    %240 = vmatprep.subr.mxu0 0.0
    %241 = vmatpush1.msra.mxu0 0.0
    %242 = vmatprep.subr.mxu0 0.0
    %243 = vmatpush1.msra.mxu0 0.0
    %244 = vmatprep.subr.mxu0 0.0
    %245 = vmatpush1.msra.mxu0 0.0
    %246 = vmatprep.subr.mxu0 0.0
    %247 = vmatpush1.msra.mxu0 0.0
    %248 = vmatprep.subr.mxu0 0.0
    %249 = vmatpush1.msra.mxu0 0.0
    %250 = vmatprep.subr.mxu0 0.0
    %251 = vmatpush1.msra.mxu0 0.0
    %252 = vmatprep.subr.mxu0 0.0
    %253 = vmatpush1.msra.mxu0 0.0
    %254 = vmatprep.subr.mxu0 0.0
    %255 = vmatpush1.msra.mxu0 0.0
    %256 = vmatprep.subr.mxu0 0.0
    %257 = vmatpush1.msra.mxu0 0.0
    %258 = vmatprep.subr.mxu0 0.0
    %259 = vmatpush1.msra.mxu0 0.0
    %260 = vmatprep.subr.mxu0 0.0
    %261 = vmatpush1.msra.mxu0 0.0
    %262 = vmatprep.subr.mxu0 0.0
    %263 = vmatpush1.msra.mxu0 0.0
    %264 = vmatprep.mubr.f32.mxu0 0.0
    %265 = vmatmul.mubr.f32.gmra.mrb[0].mxu0 %v198
    %v266 = vpop.f32.mrb[0].mxu0
    %v267 = vadd.f32 %v194, %v266
    %v268 = vpop.f32.mrb[0].mxu0
    %269 = vdwg.mxu0
    %270 = vst [vmem:[#allocation5] sm:$0xff] %v267
    // Predicated region
    $region22: #{tpu_custom_call.1} parent=1 // pred_check
      _
    $region23: #{tpu_custom_call.1} parent=1 // pred_check_branch
      %272 = sbr.rel (0) target = $region25
    $region24: #{tpu_custom_call.1} parent=1 // pred_region
      %s274 = ssub.s32 128, 128
      %275 = vsyncadd [#allocation4], %s274
      %s277 = sshll.u32 [#allocation5], 4
      %s278 = int_to_ptr.vmem [resolvable:$true] %s277
      %280 = dma.vmem_to_hbm [thread:$0]  %s278, 128, %s4, [#allocation4]
    $region25: #{tpu_custom_call.1} parent=1 // pred_fallthru
      _
    // Predicated region
    $region26: #{tpu_custom_call.1} parent=1 // pred_check
      _
    $region27: #{tpu_custom_call.1} parent=1 // pred_check_branch
      %282 = sbr.rel (0) target = $region29
    $region28: #{tpu_custom_call.1} parent=1 // pred_region
      %283 = dma.done [#allocation4], 128
    $region29: #{tpu_custom_call.1} parent=1 // pred_fallthru
      _
    %284 = vsyncpa [#allocation3], 1
    %285 = vsyncpa [#allocation4], 1

</llo_original>
